<compile_context>
chip_gen: v7x
topology: tpu7x:2x2x1
jax: 0.10.0
libtpu: 0.0.40
codegen_flags: <defaults>
</compile_context>

<pallas_src>
import functools

import jax
import jax.numpy as jnp
from jax import lax
from jax.experimental import pallas as pl
from jax.experimental.pallas import tpu as pltpu


def _round_up(x, m):
    return ((x + m - 1) // m) * m


def edge_embedding_kernel(x_ref, w_ref, b_ref, out_ref, *, precision):
    # Fused hot path per row tile: (cast ->) matmul -> bias -> relu, all in VMEM.
    x = x_ref[...].astype(jnp.float32)                 # in-kernel cast (free VPU slack)
    y = jnp.dot(x, w_ref[...],
                preferred_element_type=jnp.float32,
                precision=precision)                   # [tm, V] @ [V, D] -> [tm, D]
    y = y + b_ref[...]                                 # bias broadcast [1, D]
    out_ref[...] = jnp.maximum(y, 0.0).astype(out_ref.dtype)


def edge_embedding_forward(edge_attr, emb_w, lin_w_t, lin_b, *,
                           tm=8192, out_dtype=jnp.float32, precision=None):
    """Fused EdgeEmbedding forward.

    edge_attr : [N, V] (any float/int dtype; cast to f32 in-kernel, like .float())
    emb_w     : [V, E]  embedding table
    lin_w_t   : [E, D]  Linear(E, D) weight, pre-transposed
    lin_b     : [D]     Linear bias
    returns   : [N, D]  relu((edge_attr @ emb_w) @ lin_w_t + lin_b)
    """
    N, V = edge_attr.shape
    E, D = lin_w_t.shape
    assert emb_w.shape == (V, E)
    assert lin_b.shape == (D,)

    # One-time weight fusion in XLA (V*E*D flops, negligible): [V, D].
    w_fused = jnp.dot(emb_w.astype(jnp.float32), lin_w_t.astype(jnp.float32),
                      preferred_element_type=jnp.float32, precision=precision)
    b2 = lin_b.reshape(1, D).astype(jnp.float32)

    # Row-tile multiple of 32 covers the sublane tiling rule for f32/bf16/int8
    # inputs and f32/bf16 outputs.
    mult = 32
    tm_req = max(mult, _round_up(int(tm), mult))
    # Keep the row grid >= 2 steps whenever there are enough rows so the
    # "parallel" axis can actually shard across v7x's two TensorCores.
    if N >= 2 * mult:
        tm_req = min(tm_req, _round_up(pl.cdiv(N, 2), mult))
    # Never make the block much bigger than the array.
    tm_eff = min(tm_req, _round_up(N, mult))
    grid = (pl.cdiv(N, tm_eff),)

    in_bytes = jnp.dtype(edge_attr.dtype).itemsize
    out_bytes = jnp.dtype(out_dtype).itemsize
    cost = pl.CostEstimate(
        flops=2 * N * V * D,
        transcendentals=0,
        bytes_accessed=N * V * in_bytes + N * D * out_bytes + V * D * 4 + D * 4,
    )

    kernel = functools.partial(edge_embedding_kernel, precision=precision)

    # Ragged N is handled by the partial last block (reads padded, writes
    # masked by Pallas), so no jnp.pad / output slice is needed.
    out = pl.pallas_call(
        kernel,
        out_shape=jax.ShapeDtypeStruct((N, D), out_dtype),
        grid_spec=pltpu.PrefetchScalarGridSpec(
            num_scalar_prefetch=0,
            grid=grid,
            in_specs=[
                pl.BlockSpec((tm_eff, V), lambda i: (i, 0)),   # row tile of edge_attr
                pl.BlockSpec((V, D), lambda i: (0, 0)),        # fused weight (resident)
                pl.BlockSpec((1, D), lambda i: (0, 0)),        # bias (resident)
            ],
            out_specs=pl.BlockSpec((tm_eff, D), lambda i: (i, 0)),
        ),
        compiler_params=pltpu.CompilerParams(
            dimension_semantics=("parallel",),
            vmem_limit_bytes=32 * 1024 * 1024,
        ),
        cost_estimate=cost,
    )(edge_attr, w_fused, b2)

    return out


def edge_embedding_ref(edge_attr, emb_w, lin_w_t, lin_b):
    # Unfused reference, matching the PyTorch forward op-for-op.
    y = edge_attr.astype(jnp.float32) @ emb_w
    y = y @ lin_w_t + lin_b
    return jnp.maximum(y, 0.0)


# TODO(synk): TransformerConv's graph message passing (edge_softmax + scatter-add
# over arbitrary graph connectivity) is not kernelized here; only the dense
# EdgeEmbedding forward is implemented as a Pallas kernel.


if __name__ == "__main__":
    key = jax.random.PRNGKey(0)
    k0, k1, k2, k3 = jax.random.split(key, 4)

    # Small, module-consistent shapes.
    # Transformer.__init__ builds EdgeEmbedding(input_size, input_size, args),
    # so edge_embedding_dim == output_dim == input_size.
    N = 100                    # number of edges (deliberately NOT a tile multiple)
    V = 8                      # args.num_edge_embeddings (edge-type vocab)
    E = 128                    # edge_embedding_dim  (= input_size)
    D = 128                    # output_dim          (= input_size)

    # edge_attr: per-edge soft weights over edge types (matches the matmul with
    # the full embedding table in the reference forward).
    edge_attr = jax.random.uniform(k0, (N, V), dtype=jnp.float32)

    # Deterministic synthetic parameters (shapes from __init__):
    # nn.Embedding(V, E).weight ~ N(0, 1)
    emb_w = jax.random.normal(k1, (V, E), dtype=jnp.float32)
    # nn.Linear(E, D): weight [D, E] ~ U(-1/sqrt(E), 1/sqrt(E)); pre-transpose to [E, D]
    bound = 1.0 / (E ** 0.5)
    lin_w = jax.random.uniform(k2, (D, E), minval=-bound, maxval=bound,
                               dtype=jnp.float32)
    lin_b = jax.random.uniform(k3, (D,), minval=-bound, maxval=bound,
                               dtype=jnp.float32)
    lin_w_t = lin_w.T

    ref = edge_embedding_ref(edge_attr, emb_w, lin_w_t, lin_b)

    # Default large tile: tile is capped to ~ceil(N/2) -> 2-step grid, last
    # block ragged (exercises the masked partial write path, no pad/slice).
    out = edge_embedding_forward(edge_attr, emb_w, lin_w_t, lin_b)
    out = jax.block_until_ready(out)
    assert out.shape == (N, D)
    assert jnp.allclose(out, ref, atol=1e-4, rtol=1e-4), "mismatch vs JAX reference"

    # Small tile to exercise the multi-step grid + ragged last block path.
    out2 = edge_embedding_forward(edge_attr, emb_w, lin_w_t, lin_b, tm=32)
    out2 = jax.block_until_ready(out2)
    assert out2.shape == (N, D)
    assert jnp.allclose(out2, ref, atol=1e-4, rtol=1e-4), "mismatch (tiled) vs reference"

    # bf16 output knob (halves the dominant N x D HBM write when downstream
    # layers accept bf16): looser tolerance vs the f32 reference.
    out3 = edge_embedding_forward(edge_attr, emb_w, lin_w_t, lin_b,
                                  out_dtype=jnp.bfloat16)
    out3 = jax.block_until_ready(out3)
    assert out3.shape == (N, D)
    assert jnp.allclose(out3.astype(jnp.float32), ref, atol=5e-2, rtol=5e-2), \
        "mismatch (bf16 out) vs reference"

    print("KERNEL_OK")
</pallas_src>

<mosaic_0001>
module attributes {stable_mosaic.version = 11 : i64} {
  func.func @edge_embedding_kernel(%arg0: i32, %arg1: memref<64x8xf32, #tpu.memory_space<vmem>>, %arg2: memref<8x128xf32, #tpu.memory_space<vmem>>, %arg3: memref<1x128xf32, #tpu.memory_space<vmem>>, %arg4: memref<64x128xf32, #tpu.memory_space<vmem>>) attributes {dimension_semantics = [#tpu.dimension_semantics<parallel>], iteration_bounds = array<i64: 2>, scalar_prefetch = 0 : i64, scratch_operands = 0 : i64, tpu.core_type = #tpu.core_type<tc>, window_params = [{transform_indices = @transform_0, window_bounds = array<i64: 64, 8>}, {pipeline_mode = #tpu.pipeline_mode<synchronous>, transform_indices = @transform_1, window_bounds = array<i64: 8, 128>}, {pipeline_mode = #tpu.pipeline_mode<synchronous>, transform_indices = @transform_2, window_bounds = array<i64: 1, 128>}, {transform_indices = @transform_3, window_bounds = array<i64: 64, 128>}]} {
    %c0 = arith.constant 0 : index
    %c0_0 = arith.constant 0 : index
    %0 = vector.load %arg1[%c0, %c0_0] : memref<64x8xf32, #tpu.memory_space<vmem>>, vector<64x8xf32>
    %c0_1 = arith.constant 0 : index
    %c0_2 = arith.constant 0 : index
    %1 = vector.load %arg2[%c0_1, %c0_2] : memref<8x128xf32, #tpu.memory_space<vmem>>, vector<8x128xf32>
    %cst = arith.constant dense<0.000000e+00> : vector<64x128xf32>
    %2 = tpu.matmul %0, %1, %cst {dimension_numbers = #tpu.dot_dimension_numbers<[1], [0], [0], [1], [0, 0, 1, 1], [], []>} : vector<64x8xf32>, vector<8x128xf32>, vector<64x128xf32> -> vector<64x128xf32>
    %c0_3 = arith.constant 0 : index
    %c0_4 = arith.constant 0 : index
    %3 = vector.load %arg3[%c0_3, %c0_4] : memref<1x128xf32, #tpu.memory_space<vmem>>, vector<1x128xf32>
    %4 = vector.broadcast %3 : vector<1x128xf32> to vector<64x128xf32>
    %5 = arith.addf %2, %4 : vector<64x128xf32>
    %cst_5 = arith.constant 0.000000e+00 : f32
    %6 = vector.broadcast %cst_5 : f32 to vector<64x128xf32>
    %7 = arith.maximumf %5, %6 : vector<64x128xf32>
    %c0_6 = arith.constant 0 : index
    %c0_7 = arith.constant 0 : index
    %8 = vector.load %arg4[%c0_6, %c0_7] : memref<64x128xf32, #tpu.memory_space<vmem>>, vector<64x128xf32>
    tpu.vector_store %arg4[%c0_6, %c0_7], %7 {strides = array<i32>} : memref<64x128xf32, #tpu.memory_space<vmem>>, vector<64x128xf32>,
    return
  }
  func.func @transform_0(%arg0: i32) -> (i32, i32) {
    %c0_i32 = arith.constant 0 : i32
    %c0_i32_0 = arith.constant 0 : i32
    return %arg0, %c0_i32 : i32, i32
  }
  func.func @transform_1(%arg0: i32) -> (i32, i32) {
    %c0_i32 = arith.constant 0 : i32
    %c0_i32_0 = arith.constant 0 : i32
    %c0_i32_1 = arith.constant 0 : i32
    return %c0_i32, %c0_i32_0 : i32, i32
  }
  func.func @transform_2(%arg0: i32) -> (i32, i32) {
    %c0_i32 = arith.constant 0 : i32
    %c0_i32_0 = arith.constant 0 : i32
    %c0_i32_1 = arith.constant 0 : i32
    return %c0_i32, %c0_i32_0 : i32, i32
  }
  func.func @transform_3(%arg0: i32) -> (i32, i32) {
    %c0_i32 = arith.constant 0 : i32
    %c0_i32_0 = arith.constant 0 : i32
    return %arg0, %c0_i32 : i32, i32
  }
}

</mosaic_0001>

<llo_original>
// kernel: tpu_custom_call.1
$region0: #{tpu_custom_call.1}
  #allocation0 [shape = 'u32[]', space=smem, size = 0x4, offset = 0x4, fixed_abs, tag = 'smem constant byte address 0x4 - core index']
  #allocation1 [shape = 'u32[144,128]{1,0:T(1,128)}', space=vmem, size = 0x12000, scoped, tag = 'internal scratch']
  %s0 = inlined_call_operand.vmem [shape: f32[100,8], index: 0, kind: input, shape index: {}]
  %s1 = inlined_call_operand.vmem [shape: f32[8,128], index: 1, kind: input, shape index: {}]
  %s2 = inlined_call_operand.vmem [shape: f32[1,128], index: 2, kind: input, shape index: {}]
  %s3 = inlined_call_operand.hbm [shape: f32[100,128], index: 3, kind: output, shape index: {}]
  %s4 = sld [smem:[#allocation0]]
  $region45: #{tpu_custom_call.1} parent=0
    _
  %s6 = ssub.s32 1, %s4
  %s7 = scalar_select 0, %s6, %s4
  $region1: #{tpu_custom_call.1} parent=0
    #allocation2 [shape = 'u8[65536]{0}', space=vmem, size = 0x10000, scoped, tag = 'output window, operand 0']
    #allocation3 [shape = 's32[2]{0}', space=sflag, size = 0x8, scoped, tag = 'scoped memory for tpu_custom_call.1']
    %8 = vsyncpa [#allocation3], 0
    %s9 = scalar_lea.sflag [#allocation3], 1
    %10 = vsyncpa %s9, 0
    loop: start=0, step=1, limit=4
    $region2: #{tpu_custom_call.1} parent=1 // loop_pre_header
      _
    $region3: #{tpu_custom_call.1} parent=1 // loop_header
      %s12 = sphi 0, %s16
      %p13 = scmp.ge.s32.totalorder %s12, 4
      %s22 = sphi 0, %s24
      %s25 = sphi 0, %s22
      %s26 = sphi 0, %s25
      %s42 = sphi 0, %s26
      %s46 = sphi 0, %s46
      %s48 = sphi 0, %s46
      %s49 = sphi 0, %s48
      %s63 = sphi 0, %s49
      %s67 = sphi 0, %s67
      %s69 = sphi 0, %s67
      %s70 = sphi 0, %s69
      %s84 = sphi 0, %s70
      %s90 = sphi 0, %s92
      %s93 = sphi 0, %s90
      %s94 = sphi 0, %s93
      %s110 = sphi 0, %s94
    $region4: #{tpu_custom_call.1} parent=1 // loop_header_branch
      %15 = sbr.rel (%p13) target = $region8
    $region5: #{tpu_custom_call.1} parent=1 // loop_body
      %s17 = ssub.s32 %s12, 1
      %s18 = ssub.s32 %s12, 2
      %s19 = sadd.s32 %s12, 1
      %s20 = ssub.s32 %s12, %s19
      %p21 = scmp.eq.s32.totalorder %s20, 0
      %s23 = sadd.s32 %s22, 1
      %s24 = scalar_select %p21, %s22, %s23
      %p27 = pneg %p21
      %p28 = scmp.eq.s32.totalorder %s12, 1
      %p29 = por %p27, %p28
      %p30 = scmp.ne.s32.totalorder %s22, %s25
      %p31 = scmp.eq.s32.totalorder %s12, 0
      %p32 = por %p30, %p31
      %p33 = scmp.ne.s32.totalorder %s22, %s25
      %p34 = scmp.eq.s32.totalorder %s17, 1
      %p35 = por %p33, %p34
      %p36 = scmp.ne.s32.totalorder %s25, %s26
      %p37 = scmp.eq.s32.totalorder %s17, 0
      %p38 = por %p36, %p37
      %p39 = scmp.ne.s32.totalorder %s25, %s26
      %p40 = scmp.eq.s32.totalorder %s18, 1
      %p41 = por %p39, %p40
      %p43 = scmp.ne.s32.totalorder %s26, %s42
      %p44 = scmp.eq.s32.totalorder %s18, 0
      %p45 = por %p43, %p44
      %s47 = sadd.s32 %s46, 1
      %p50 = scmp.eq.s32.totalorder %s12, 1
      %p51 = scmp.ne.s32.totalorder %s46, %s48
      %p52 = scmp.eq.s32.totalorder %s12, 0
      %p53 = por %p51, %p52
      %p54 = scmp.ne.s32.totalorder %s46, %s48
      %p55 = scmp.eq.s32.totalorder %s17, 1
      %p56 = por %p54, %p55
      %p57 = scmp.ne.s32.totalorder %s48, %s49
      %p58 = scmp.eq.s32.totalorder %s17, 0
      %p59 = por %p57, %p58
      %p60 = scmp.ne.s32.totalorder %s48, %s49
      %p61 = scmp.eq.s32.totalorder %s18, 1
      %p62 = por %p60, %p61
      %p64 = scmp.ne.s32.totalorder %s49, %s63
      %p65 = scmp.eq.s32.totalorder %s18, 0
      %p66 = por %p64, %p65
      %s68 = sadd.s32 %s67, 1
      %p71 = scmp.eq.s32.totalorder %s12, 1
      %p72 = scmp.ne.s32.totalorder %s67, %s69
      %p73 = scmp.eq.s32.totalorder %s12, 0
      %p74 = por %p72, %p73
      %p75 = scmp.ne.s32.totalorder %s67, %s69
      %p76 = scmp.eq.s32.totalorder %s17, 1
      %p77 = por %p75, %p76
      %p78 = scmp.ne.s32.totalorder %s69, %s70
      %p79 = scmp.eq.s32.totalorder %s17, 0
      %p80 = por %p78, %p79
      %p81 = scmp.ne.s32.totalorder %s69, %s70
      %p82 = scmp.eq.s32.totalorder %s18, 1
      %p83 = por %p81, %p82
      %p85 = scmp.ne.s32.totalorder %s70, %s84
      %p86 = scmp.eq.s32.totalorder %s18, 0
      %p87 = por %p85, %p86
      %s88 = ssub.s32 %s12, %s19
      %p89 = scmp.eq.s32.totalorder %s88, 0
      %s91 = sadd.s32 %s90, 1
      %s92 = scalar_select %p89, %s90, %s91
      %p95 = pneg %p89
      %p96 = scmp.eq.s32.totalorder %s12, 1
      %p97 = por %p95, %p96
      %p98 = scmp.ne.s32.totalorder %s90, %s93
      %p99 = scmp.eq.s32.totalorder %s12, 0
      %p100 = por %p98, %p99
      %p101 = scmp.ne.s32.totalorder %s90, %s93
      %p102 = scmp.eq.s32.totalorder %s17, 1
      %p103 = por %p101, %p102
      %p104 = scmp.ne.s32.totalorder %s93, %s94
      %p105 = scmp.eq.s32.totalorder %s17, 0
      %p106 = por %p104, %p105
      %p107 = scmp.ne.s32.totalorder %s93, %s94
      %p108 = scmp.eq.s32.totalorder %s18, 1
      %p109 = por %p107, %p108
      %p111 = scmp.ne.s32.totalorder %s94, %s110
      %p112 = scmp.eq.s32.totalorder %s18, 0
      %p113 = por %p111, %p112
      %p114 = scmp.le.s32.totalorder 1, %s12
      %p115 = scmp.lt.s32.totalorder %s12, 3
      %p116 = pnand %p114, %p115
      %p117 = pneg %p116
      // Predicated region
      $region9: #{tpu_custom_call.1} parent=5 // pred_check
        _
      $region10: #{tpu_custom_call.1} parent=5 // pred_check_branch
        %119 = sbr.rel (%p116) target = $region12
      $region11: #{tpu_custom_call.1} parent=5 // pred_region
        %s120 = ssub.s32 %s12, 1
        // Predicated region
        $region13: #{tpu_custom_call.1} parent=11 // pred_check
          %p121 = pneg %p59
        $region14: #{tpu_custom_call.1} parent=11 // pred_check_branch
          %123 = sbr.rel (%p121) target = $region16
        $region15: #{tpu_custom_call.1} parent=11 // pred_region
          _
        $region16: #{tpu_custom_call.1} parent=11 // pred_fallthru
          _
        // Predicated region
        $region17: #{tpu_custom_call.1} parent=11 // pred_check
          %p124 = pneg %p80
        $region18: #{tpu_custom_call.1} parent=11 // pred_check_branch
          %126 = sbr.rel (%p124) target = $region20
        $region19: #{tpu_custom_call.1} parent=11 // pred_region
          _
        $region20: #{tpu_custom_call.1} parent=11 // pred_fallthru
          _
      $region12: #{tpu_custom_call.1} parent=5 // pred_fallthru
        _
      %p127 = scmp.lt.s32.totalorder %s12, 2
      // Predicated region
      $region21: #{tpu_custom_call.1} parent=5 // pred_check
        %p128 = pneg %p127
      $region22: #{tpu_custom_call.1} parent=5 // pred_check_branch
        %130 = sbr.rel (%p128) target = $region24
      $region23: #{tpu_custom_call.1} parent=5 // pred_region
        // Predicated region
        $region25: #{tpu_custom_call.1} parent=23 // pred_check
          %p131 = pneg %p32
        $region26: #{tpu_custom_call.1} parent=23 // pred_check_branch
          %133 = sbr.rel (%p131) target = $region28
        $region27: #{tpu_custom_call.1} parent=23 // pred_region
          %s134 = smul.u32 8, %s12
          %s135 = ssub.s32 13, %s134
          %p136 = scmp.lt.s32.totalorder %s135, 8
          %s137 = scalar_select %p136, %s135, 8
          %s138 = smul.u32 128, %s137
          %p139 = scmp.lt.s32.totalorder %s134, 12
          %s140 = scalar_select %p139, %s134, 12
          %s141 = smul.addr %s140, 8
          %s142 = scalar_lea.vmem %s0, %s141
          %s143 = smul.u32 8, %s12
          %s144 = ssub.s32 13, %s143
          %p145 = scmp.lt.s32.totalorder %s144, 8
          %s146 = scalar_select %p145, %s144, 8
          %s147 = smul.u32 128, %s146
        $region28: #{tpu_custom_call.1} parent=23 // pred_fallthru
          _
      $region24: #{tpu_custom_call.1} parent=5 // pred_fallthru
        _
      %p148 = scmp.le.s32.totalorder 1, %s12
      %p149 = scmp.lt.s32.totalorder %s12, 3
      %p150 = pnand %p148, %p149
      %p151 = pneg %p150
      // Predicated region
      $region29: #{tpu_custom_call.1} parent=5 // pred_check
        _
      $region30: #{tpu_custom_call.1} parent=5 // pred_check_branch
        %153 = sbr.rel (%p150) target = $region32
      $region31: #{tpu_custom_call.1} parent=5 // pred_region
        %s154 = ssub.s32 %s12, 1
        %s155 = smul.u32 8, %s17
        %s156 = ssub.s32 13, %s155
        %p157 = scmp.lt.s32.totalorder %s156, 8
        %s158 = scalar_select %p157, %s156, 8
        %s159 = smul.u32 128, %s158
        %p160 = scmp.lt.s32.totalorder %s155, 12
        %s161 = scalar_select %p160, %s155, 12
        %s162 = smul.addr %s161, 8
        %s163 = scalar_lea.vmem %s0, %s162
        %p164 = pneg %p38
        %p165 = pneg %p35
        %p166 = pneg %p59
        %p167 = pneg %p56
        %p168 = pneg %p80
        %p169 = pneg %p77
        %p170 = pneg %p106
        %p171 = pneg %p103
        %s172 = sand.u32 %s93, 1
        %s173 = scalar_lea.sflag [#allocation3], %s172
        %s174 = sand.u32 %s93, 1
        %s175 = smul.addr %s174, 64
        %s176 = scalar_lea.vmem [#allocation2], %s175
        %s177 = smul.u32 8, %s17
        %s178 = ssub.s32 13, %s177
        %p179 = scmp.lt.s32.totalorder %s178, 8
        %s180 = scalar_select %p179, %s178, 8
        %s181 = smul.u32 128, %s180
        %p182 = scmp.lt.s32.totalorder %s177, 12
        %s183 = scalar_select %p182, %s177, 12
        %s184 = smul.addr %s183, 8
        %s185 = scalar_lea.vmem %s0, %s184
        %s186 = smul.u32 8, %s17
        %s187 = ssub.s32 13, %s186
        %p188 = scmp.lt.s32.totalorder %s187, 8
        %s189 = scalar_select %p188, %s187, 8
        %s190 = smul.u32 128, %s189
        %s191 = smul.u32 8, %s17
        %s192 = ssub.s32 13, %s191
        %p193 = scmp.lt.s32.totalorder %s192, 8
        %s194 = scalar_select %p193, %s192, 8
        %s195 = smul.u32 128, %s194
        %v196 = vld [vmem:[%s185] sm:$0xff]
        %v197 = vld [vmem:[%s185 + $0x8] sm:$0xff]
        %v198 = vld [vmem:[%s185 + $0x10] sm:$0xff]
        %v199 = vld [vmem:[%s185 + $0x18] sm:$0xff]
        %v200 = vld [vmem:[%s185 + $0x20] sm:$0xff]
        %v201 = vld [vmem:[%s185 + $0x28] sm:$0xff]
        %v202 = vld [vmem:[%s185 + $0x30] sm:$0xff]
        %v203 = vld [vmem:[%s185 + $0x38] sm:$0xff]
        %v204 = vld [vmem:[%s1] sm:$0xff]
        %v205 = vld [vmem:[%s2] sm:$0x1]
        %v207 = vlaneseq
        %v208 = vshrl.u32 %v207, 7
        %v209 = vsub.s32 0, %v208
        %v210 = vrot.slane %v205, %v209
        %vm212 = vcmask 64512
        %v214 = vsel %vm212, %v196, 0
        %v217 = vsel %vm212, %v197, 0
        %v220 = vsel %vm212, %v198, 0
        %v223 = vsel %vm212, %v199, 0
        %v226 = vsel %vm212, %v200, 0
        %v229 = vsel %vm212, %v201, 0
        %v232 = vsel %vm212, %v202, 0
        %v235 = vsel %vm212, %v203, 0
        %237 = vmatprep.subr.mxu0 0.0
        %238 = vmatpush1.msra.mxu0 %v204
        %239 = vmatprep.subr.mxu0 0.0
        %240 = vmatpush1.msra.mxu0 0.0
        %241 = vmatprep.subr.mxu0 0.0
        %242 = vmatpush1.msra.mxu0 0.0
        %243 = vmatprep.subr.mxu0 0.0
        %244 = vmatpush1.msra.mxu0 0.0
        %245 = vmatprep.subr.mxu0 0.0
        %246 = vmatpush1.msra.mxu0 0.0
        %247 = vmatprep.subr.mxu0 0.0
        %248 = vmatpush1.msra.mxu0 0.0
        %249 = vmatprep.subr.mxu0 0.0
        %250 = vmatpush1.msra.mxu0 0.0
        %251 = vmatprep.subr.mxu0 0.0
        %252 = vmatpush1.msra.mxu0 0.0
        %253 = vmatprep.subr.mxu0 0.0
        %254 = vmatpush1.msra.mxu0 0.0
        %255 = vmatprep.subr.mxu0 0.0
        %256 = vmatpush1.msra.mxu0 0.0
        %257 = vmatprep.subr.mxu0 0.0
        %258 = vmatpush1.msra.mxu0 0.0
        %259 = vmatprep.subr.mxu0 0.0
        %260 = vmatpush1.msra.mxu0 0.0
        %261 = vmatprep.subr.mxu0 0.0
        %262 = vmatpush1.msra.mxu0 0.0
        %263 = vmatprep.subr.mxu0 0.0
        %264 = vmatpush1.msra.mxu0 0.0
        %265 = vmatprep.subr.mxu0 0.0
        %266 = vmatpush1.msra.mxu0 0.0
        %267 = vmatprep.subr.mxu0 0.0
        %268 = vmatpush1.msra.mxu0 0.0
        %269 = vmatprep.subr.mxu0 0.0
        %270 = vmatpush1.msra.mxu0 0.0
        %271 = vmatprep.subr.mxu0 0.0
        %272 = vmatpush1.msra.mxu0 0.0
        %273 = vmatprep.subr.mxu0 0.0
        %274 = vmatpush1.msra.mxu0 0.0
        %275 = vmatprep.subr.mxu0 0.0
        %276 = vmatpush1.msra.mxu0 0.0
        %277 = vmatprep.subr.mxu0 0.0
        %278 = vmatpush1.msra.mxu0 0.0
        %279 = vmatprep.subr.mxu0 0.0
        %280 = vmatpush1.msra.mxu0 0.0
        %281 = vmatprep.subr.mxu0 0.0
        %282 = vmatpush1.msra.mxu0 0.0
        %283 = vmatprep.subr.mxu0 0.0
        %284 = vmatpush1.msra.mxu0 0.0
        %285 = vmatprep.subr.mxu0 0.0
        %286 = vmatpush1.msra.mxu0 0.0
        %287 = vmatprep.subr.mxu0 0.0
        %288 = vmatpush1.msra.mxu0 0.0
        %289 = vmatprep.subr.mxu0 0.0
        %290 = vmatpush1.msra.mxu0 0.0
        %291 = vmatprep.subr.mxu0 0.0
        %292 = vmatpush1.msra.mxu0 0.0
        %293 = vmatprep.subr.mxu0 0.0
        %294 = vmatpush1.msra.mxu0 0.0
        %295 = vmatprep.subr.mxu0 0.0
        %296 = vmatpush1.msra.mxu0 0.0
        %297 = vmatprep.subr.mxu0 0.0
        %298 = vmatpush1.msra.mxu0 0.0
        %299 = vmatprep.subr.mxu0 0.0
        %300 = vmatpush1.msra.mxu0 0.0
        %301 = vmatprep.mubr.f32.mxu0 0.0
        %302 = vmatmul.mubr.f32.gmra.mrb[0].mxu0 %v214
        %v303 = vpop.f32.mrb[0].mxu0
        %v304 = vadd.f32 %v210, %v303
        %v305 = vpop.f32.mrb[0].mxu0
        %306 = vmatprep.mubr.f32.mxu0 0.0
        %307 = vmatmul.mubr.f32.gmra.mrb[0].mxu0 %v217
        %v308 = vpop.f32.mrb[0].mxu0
        %v309 = vadd.f32 %v210, %v308
        %v310 = vpop.f32.mrb[0].mxu0
        %311 = vmatprep.mubr.f32.mxu0 0.0
        %312 = vmatmul.mubr.f32.gmra.mrb[0].mxu0 %v220
        %v313 = vpop.f32.mrb[0].mxu0
        %v314 = vadd.f32 %v210, %v313
        %v315 = vpop.f32.mrb[0].mxu0
        %316 = vmatprep.mubr.f32.mxu0 0.0
        %317 = vmatmul.mubr.f32.gmra.mrb[0].mxu0 %v223
        %v318 = vpop.f32.mrb[0].mxu0
        %v319 = vadd.f32 %v210, %v318
        %v320 = vpop.f32.mrb[0].mxu0
        %321 = vmatprep.mubr.f32.mxu0 0.0
        %322 = vmatmul.mubr.f32.gmra.mrb[0].mxu0 %v226
        %v323 = vpop.f32.mrb[0].mxu0
        %v324 = vadd.f32 %v210, %v323
        %v325 = vpop.f32.mrb[0].mxu0
        %326 = vmatprep.mubr.f32.mxu0 0.0
        %327 = vmatmul.mubr.f32.gmra.mrb[0].mxu0 %v229
        %v328 = vpop.f32.mrb[0].mxu0
        %v329 = vadd.f32 %v210, %v328
        %v330 = vpop.f32.mrb[0].mxu0
        %331 = vmatprep.mubr.f32.mxu0 0.0
        %332 = vmatmul.mubr.f32.gmra.mrb[0].mxu0 %v232
        %v333 = vpop.f32.mrb[0].mxu0
        %v334 = vadd.f32 %v210, %v333
        %v335 = vpop.f32.mrb[0].mxu0
        %336 = vmatprep.mubr.f32.mxu0 0.0
        %337 = vmatmul.mubr.f32.gmra.mrb[0].mxu0 %v235
        %v338 = vpop.f32.mrb[0].mxu0
        %v339 = vadd.f32 %v210, %v338
        %v340 = vpop.f32.mrb[0].mxu0
        %341 = vdwg.mxu0
        %v342 = vmax.f32 %v304, 0.0
        %v343 = vmax.f32 %v309, 0.0
        %v344 = vmax.f32 %v314, 0.0
        %v345 = vmax.f32 %v319, 0.0
        %v346 = vmax.f32 %v324, 0.0
        %v347 = vmax.f32 %v329, 0.0
        %v348 = vmax.f32 %v334, 0.0
        %v349 = vmax.f32 %v339, 0.0
        %350 = vst [vmem:[%s176] sm:$0xff] %v342
        %351 = vst [vmem:[%s176 + $0x8] sm:$0xff] %v343
        %352 = vst [vmem:[%s176 + $0x10] sm:$0xff] %v344
        %353 = vst [vmem:[%s176 + $0x18] sm:$0xff] %v345
        %354 = vst [vmem:[%s176 + $0x20] sm:$0xff] %v346
        %355 = vst [vmem:[%s176 + $0x28] sm:$0xff] %v347
        %356 = vst [vmem:[%s176 + $0x30] sm:$0xff] %v348
        %357 = vst [vmem:[%s176 + $0x38] sm:$0xff] %v349
        %s358 = sand.u32 %s93, 1
        %s359 = scalar_lea.sflag [#allocation3], %s358
        %s360 = sand.u32 %s93, 1
        %s361 = smul.addr %s360, 64
        %s362 = scalar_lea.vmem [#allocation2], %s361
        // Predicated region
        $region33: #{tpu_custom_call.1} parent=31 // pred_check
          %p363 = pneg %p103
        $region34: #{tpu_custom_call.1} parent=31 // pred_check_branch
          %365 = sbr.rel (%p363) target = $region36
        $region35: #{tpu_custom_call.1} parent=31 // pred_region
          %s366 = smul.u32 8, %s17
          %s367 = ssub.s32 13, %s366
          %p368 = scmp.lt.s32.totalorder %s367, 8
          %s369 = scalar_select %p368, %s367, 8
          %s370 = smul.u32 128, %s369
          %s372 = ssub.s32 1024, %s370
          %373 = vsyncadd %s359, %s372
          %p374 = scmp.ne.s32.totalorder 0, %s370
          %s375 = smul.addr %s366, 128
          %s376 = scalar_lea.hbm %s3, %s375
          %s377 = smul.u32 8, %s369
          %s378 = sshll.u32 %s362, 4
          %s379 = int_to_ptr.vmem [resolvable:$true] %s378
          %s380 = sshll.u32 %s377, 4
          %384 = dma.vmem_to_hbm [thread:$0]  (%p374), %s379, %s380, %s376, %s359, 128, 128, 8
        $region36: #{tpu_custom_call.1} parent=31 // pred_fallthru
          _
      $region32: #{tpu_custom_call.1} parent=5 // pred_fallthru
        _
      %p385 = scmp.le.s32.totalorder 2, %s12
      // Predicated region
      $region37: #{tpu_custom_call.1} parent=5 // pred_check
        %p386 = pneg %p385
      $region38: #{tpu_custom_call.1} parent=5 // pred_check_branch
        %388 = sbr.rel (%p386) target = $region40
      $region39: #{tpu_custom_call.1} parent=5 // pred_region
        %s389 = ssub.s32 %s12, 2
        // Predicated region
        $region41: #{tpu_custom_call.1} parent=39 // pred_check
          %p390 = pneg %p109
        $region42: #{tpu_custom_call.1} parent=39 // pred_check_branch
          %392 = sbr.rel (%p390) target = $region44
        $region43: #{tpu_custom_call.1} parent=39 // pred_region
          %s393 = sand.u32 %s94, 1
          %s394 = scalar_lea.sflag [#allocation3], %s393
          %s395 = sand.u32 %s94, 1
          %s396 = smul.addr %s395, 64
          %s397 = scalar_lea.vmem [#allocation2], %s396
          %398 = dma.done %s394, 1024
        $region44: #{tpu_custom_call.1} parent=39 // pred_fallthru
          _
      $region40: #{tpu_custom_call.1} parent=5 // pred_fallthru
        _
    $region6: #{tpu_custom_call.1} parent=1 // loop_footer
      %s16 = sadd.s32 1, %s12
    $region7: #{tpu_custom_call.1} parent=1 // loop_footer_branch
      %11 = sbr.rel target = $region3
    $region8: #{tpu_custom_call.1} parent=1 // loop_exit
      _
    %399 = vsyncpa [#allocation3], 1
    %s400 = scalar_lea.sflag [#allocation3], 1
    %401 = vsyncpa %s400, 1

</llo_original>
